<compile_context>
chip_gen: v7x
topology: tpu7x:2x2x1
jax: 0.10.0
libtpu: 0.0.40
codegen_flags: <defaults>
</compile_context>

<pallas_src>
import functools

import jax
import jax.numpy as jnp
from jax.experimental import pallas as pl
from jax.experimental.pallas import tpu as pltpu

NEG_SLOPE = 0.2      # GATConv default leaky-relu slope
NEG_BIAS = -1e9      # additive mask value; exp underflows to exactly 0 in f32
LANE = 128


def _round_up(x, m):
    return (x + m - 1) // m * m


# ---------------------------------------------------------------------------
# Graph preprocessing (pure glue).  For a static graph, call ONCE and reuse —
# this keeps the O(N^2) densification off the per-layer hot path.
# ---------------------------------------------------------------------------
def precompute_graph(edge_index, n, *, tm=128, tn=128):
    """Returns (adj_bias [Np,Np] bf16 additive mask, tile_nnz [ni*nj] int32)."""
    assert tm == tn, "padding assumes square tiles"
    n_pad = _round_up(n, tm)
    src, dst = edge_index[0], edge_index[1]
    adj = jnp.zeros((n_pad, n_pad), jnp.bool_).at[dst, src].set(True)
    # add_self_loops=True (also on pad rows so every row has a finite max)
    adj = jnp.logical_or(adj, jnp.eye(n_pad, dtype=jnp.bool_))
    adj_bias = jnp.where(adj, 0.0, NEG_BIAS).astype(jnp.bfloat16)
    ni, nj = n_pad // tm, n_pad // tn
    tile_nnz = (adj.astype(jnp.int32)
                .reshape(ni, tm, nj, tn).sum(axis=(1, 3))
                .astype(jnp.int32).reshape(-1))
    return adj_bias, tile_nnz


# ---------------------------------------------------------------------------
# Pass 1: node projection h = x @ W and fused attention scalars a = h @ att.
# ---------------------------------------------------------------------------
def _proj_kernel(x_ref, w_ref, att_ref, h_ref, a_ref):
    # bf16 operands on the MXU, f32 accumulation.
    h = jnp.dot(x_ref[...].astype(jnp.bfloat16), w_ref[...],
                preferred_element_type=jnp.float32)          # [TM, Dp] f32
    # One narrow matmul gives a[:,0] = <h, att_dst>, a[:,1] = <h, att_src>.
    a = jnp.dot(h, att_ref[...], preferred_element_type=jnp.float32)  # [TM,2]
    h_ref[...] = h.astype(h_ref.dtype)
    a_ref[...] = a


# ---------------------------------------------------------------------------
# Pass 2: tiled masked softmax (online / flash-style) + aggregation + epilogue.
# ---------------------------------------------------------------------------
def _attn_kernel(nnz_ref,                       # scalar prefetch (SMEM, int32)
                 a_dst_ref, a_src_ref, adj_ref, h_ref, xres_ref, b_ref,
                 out_ref,
                 m_ref, l_ref, acc_ref, *, residual):
    i = pl.program_id(0)
    j = pl.program_id(1)
    nj = pl.num_programs(1)

    @pl.when(j == 0)
    def _init():
        m_ref[...] = jnp.full_like(m_ref, -jnp.inf)
        l_ref[...] = jnp.zeros_like(l_ref)
        acc_ref[...] = jnp.zeros_like(acc_ref)

    # Block-sparse skip: adjacency tiles with no edges contribute exactly 0.
    @pl.when(nnz_ref[i * nj + j] > 0)
    def _compute():
        # scores[r, c] = LeakyReLU(a_dst[r] + a_src[c]) + adj_bias[r, c]
        s = a_dst_ref[...] + a_src_ref[...]                  # [TM, TN] f32
        s = jnp.where(s > 0, s, NEG_SLOPE * s)               # LeakyReLU(0.2)
        s = s + adj_ref[...].astype(jnp.float32)             # additive mask

        m_prev = m_ref[...]
        m_new = jnp.maximum(m_prev, jnp.max(s, axis=-1, keepdims=True))
        corr = jnp.exp(m_prev - m_new)
        # TODO(synk): on v6e/v7x the exp could run in bf16 on the EUP for ~2x
        # throughput on the binding unit; kept f32 for v5e parity / accuracy.
        p = jnp.exp(s - m_new)                               # masked -> 0.0
        l_ref[...] = corr * l_ref[...] + jnp.sum(p, axis=-1, keepdims=True)
        acc_ref[...] = corr * acc_ref[...] + jnp.dot(
            p.astype(jnp.bfloat16), h_ref[...],
            preferred_element_type=jnp.float32)              # bf16 MXU
        m_ref[...] = m_new

    @pl.when(j == nj - 1)
    def _finalize():
        inv_l = pl.reciprocal(jnp.maximum(l_ref[...], 1e-30), approx=True)
        out = acc_ref[...] * inv_l + b_ref[...]              # + GATConv bias
        out = jnp.maximum(out, 0.0)                          # ReLU
        # TODO(synk): dropout is identity (eval mode); training-mode dropout
        # would use pltpu.prng_seed / pltpu.prng_random_bits here.
        if residual:
            out = out + xres_ref[...]
        out_ref[...] = out.astype(out_ref.dtype)


# ---------------------------------------------------------------------------
# Wrapper
# ---------------------------------------------------------------------------
def gat_conv_layer(x, params, adj_bias, tile_nnz, *, residual=True,
                   tm=128, tn=128):
    """x: [N, D] f32; adj_bias/tile_nnz from precompute_graph."""
    n, d = x.shape
    w, att_src, att_dst, bias = params
    n_pad = adj_bias.shape[0]
    d_pad = _round_up(d, LANE)
    ni, nj = n_pad // tm, n_pad // tn

    # Lane-dense padding of inputs / parameters (glue).
    x_pad = jnp.zeros((n_pad, d_pad), jnp.float32).at[:n, :d].set(x)
    w_pad = jnp.zeros((d_pad, d_pad), jnp.bfloat16).at[:d, :d].set(
        w.astype(jnp.bfloat16))
    att_cat = (jnp.zeros((d_pad, 2), jnp.float32)
               .at[:d, 0].set(att_dst[:, 0])
               .at[:d, 1].set(att_src[:, 0]))
    b_pad = jnp.zeros((1, d_pad), jnp.float32).at[:, :d].set(bias)

    # ---- pass 1: projection + fused attention scalars --------------------
    h_pad, a = pl.pallas_call(
        _proj_kernel,
        out_shape=(jax.ShapeDtypeStruct((n_pad, d_pad), jnp.bfloat16),
                   jax.ShapeDtypeStruct((n_pad, 2), jnp.float32)),
        grid=(ni,),
        in_specs=[
            pl.BlockSpec((tm, d_pad), lambda i: (i, 0)),       # x tile
            pl.BlockSpec((d_pad, d_pad), lambda i: (0, 0)),    # W
            pl.BlockSpec((d_pad, 2), lambda i: (0, 0)),        # [att_dst|att_src]
        ],
        out_specs=(pl.BlockSpec((tm, d_pad), lambda i: (i, 0)),
                   pl.BlockSpec((tm, 2), lambda i: (i, 0))),
        compiler_params=pltpu.CompilerParams(
            dimension_semantics=("parallel",)),
    )(x_pad, w_pad, att_cat)

    a_dst = a[:, 0:1]               # [Np, 1]  destination attention scalar
    a_src = a[:, 1][None, :]        # [1, Np]  source attention scalar (row)

    # ---- pass 2: tiled attention + aggregation + epilogue ----------------
    kernel = functools.partial(_attn_kernel, residual=residual)
    out_pad = pl.pallas_call(
        kernel,
        out_shape=jax.ShapeDtypeStruct((n_pad, d_pad), jnp.float32),
        grid_spec=pltpu.PrefetchScalarGridSpec(
            num_scalar_prefetch=1,                # tile_nnz -> SMEM
            grid=(ni, nj),
            in_specs=[
                pl.BlockSpec((tm, 1), lambda i, j, nnz: (i, 0)),      # a_dst
                pl.BlockSpec((1, tn), lambda i, j, nnz: (0, j)),      # a_src
                pl.BlockSpec((tm, tn), lambda i, j, nnz: (i, j)),     # adj bias
                pl.BlockSpec((tn, d_pad), lambda i, j, nnz: (j, 0)),  # h (src)
                pl.BlockSpec((tm, d_pad), lambda i, j, nnz: (i, 0)),  # x (res)
                pl.BlockSpec((1, d_pad), lambda i, j, nnz: (0, 0)),   # conv bias
            ],
            out_specs=pl.BlockSpec((tm, d_pad), lambda i, j, nnz: (i, 0)),
            scratch_shapes=[
                pltpu.VMEM((tm, 1), jnp.float32),      # running max m
                pltpu.VMEM((tm, 1), jnp.float32),      # running denom l
                pltpu.VMEM((tm, d_pad), jnp.float32),  # output accumulator
            ]),
        compiler_params=pltpu.CompilerParams(
            dimension_semantics=("parallel", "arbitrary"),
            vmem_limit_bytes=32 * 1024 * 1024),        # fits v7x's 64 MiB VMEM
    )(tile_nnz, a_dst, a_src, adj_bias, h_pad, x_pad, b_pad)

    return out_pad[:n, :d]


# ---------------------------------------------------------------------------
# Pure-JAX dense reference (same dense-mask semantics; duplicate edges
# collapse, matching the kernel — see correctness note).
# ---------------------------------------------------------------------------
def _reference(x, edge_index, params, *, residual=True):
    n, d = x.shape
    w, att_src, att_dst, bias = params
    src, dst = edge_index[0], edge_index[1]
    adj = jnp.zeros((n, n), jnp.float32).at[dst, src].set(1.0)
    adj = jnp.maximum(adj, jnp.eye(n, dtype=jnp.float32))
    h = x @ w
    a_src = (h @ att_src)[:, 0]
    a_dst = (h @ att_dst)[:, 0]
    scores = a_dst[:, None] + a_src[None, :]
    scores = jnp.where(scores > 0, scores, NEG_SLOPE * scores)
    scores = jnp.where(adj > 0, scores, -jnp.inf)
    alpha = jax.nn.softmax(scores, axis=-1)
    out = alpha @ h + bias
    out = jax.nn.relu(out)
    if residual:
        out = x + out
    return out


if __name__ == "__main__":
    key = jax.random.PRNGKey(0)
    N, D, E = 200, 32, 800          # nodes, features (dim_in == dim_out), edges
    k1, k2, k3, k4, k5, k6, k7 = jax.random.split(key, 7)

    x = jax.random.normal(k1, (N, D), jnp.float32)
    src = jax.random.randint(k2, (E,), 0, N, dtype=jnp.int32)
    dst = jax.random.randint(k3, (E,), 0, N, dtype=jnp.int32)
    edge_index = jnp.stack([src, dst])

    # Deterministic synthetic GATConv parameters (shapes from the module init).
    w = jax.random.normal(k4, (D, D), jnp.float32) / jnp.sqrt(jnp.float32(D))
    att_src = jax.random.normal(k5, (D, 1), jnp.float32) * 0.1
    att_dst = jax.random.normal(k6, (D, 1), jnp.float32) * 0.1
    bias = jax.random.normal(k7, (1, D), jnp.float32) * 0.01
    params = (w, att_src, att_dst, bias)

    # Static-graph preprocessing — done once, off the per-layer hot path.
    adj_bias, tile_nnz = precompute_graph(edge_index, N, tm=128, tn=128)

    out = gat_conv_layer(x, params, adj_bias, tile_nnz, residual=True)
    jax.block_until_ready(out)

    ref = _reference(x, edge_index, params, residual=True)
    # bf16 MXU operands (x@W, alpha@h) + approx reciprocal -> relaxed tolerance.
    assert jnp.allclose(out, ref, atol=5e-2, rtol=5e-2), "mismatch vs reference"

    print("KERNEL_OK")
</pallas_src>

<mosaic_0001>
module attributes {stable_mosaic.version = 11 : i64} {
  func.func @_proj_kernel(%arg0: i32, %arg1: memref<128x128xf32, #tpu.memory_space<vmem>>, %arg2: memref<128x128xbf16, #tpu.memory_space<vmem>>, %arg3: memref<128x2xf32, #tpu.memory_space<vmem>>, %arg4: memref<128x128xbf16, #tpu.memory_space<vmem>>, %arg5: memref<128x2xf32, #tpu.memory_space<vmem>>) attributes {dimension_semantics = [#tpu.dimension_semantics<parallel>], iteration_bounds = array<i64: 2>, scalar_prefetch = 0 : i64, scratch_operands = 0 : i64, tpu.core_type = #tpu.core_type<tc>, window_params = [{transform_indices = @transform_0, window_bounds = array<i64: 128, 128>}, {pipeline_mode = #tpu.pipeline_mode<synchronous>, transform_indices = @transform_1, window_bounds = array<i64: 128, 128>}, {pipeline_mode = #tpu.pipeline_mode<synchronous>, transform_indices = @transform_2, window_bounds = array<i64: 128, 2>}, {transform_indices = @transform_3, window_bounds = array<i64: 128, 128>}, {transform_indices = @transform_4, window_bounds = array<i64: 128, 2>}]} {
    %c0 = arith.constant 0 : index
    %c0_0 = arith.constant 0 : index
    %0 = vector.load %arg1[%c0, %c0_0] : memref<128x128xf32, #tpu.memory_space<vmem>>, vector<128x128xf32>
    %1 = arith.truncf %0 : vector<128x128xf32> to vector<128x128xbf16>
    %c0_1 = arith.constant 0 : index
    %c0_2 = arith.constant 0 : index
    %2 = vector.load %arg2[%c0_1, %c0_2] : memref<128x128xbf16, #tpu.memory_space<vmem>>, vector<128x128xbf16>
    %cst = arith.constant dense<0.000000e+00> : vector<128x128xf32>
    %3 = tpu.matmul %1, %2, %cst {dimension_numbers = #tpu.dot_dimension_numbers<[1], [0], [0], [1], [0, 0, 1, 1], [], []>} : vector<128x128xbf16>, vector<128x128xbf16>, vector<128x128xf32> -> vector<128x128xf32>
    %c0_3 = arith.constant 0 : index
    %c0_4 = arith.constant 0 : index
    %4 = vector.load %arg3[%c0_3, %c0_4] : memref<128x2xf32, #tpu.memory_space<vmem>>, vector<128x2xf32>
    %cst_5 = arith.constant dense<0.000000e+00> : vector<128x2xf32>
    %5 = tpu.matmul %3, %4, %cst_5 {dimension_numbers = #tpu.dot_dimension_numbers<[1], [0], [0], [1], [0, 0, 1, 1], [], []>} : vector<128x128xf32>, vector<128x2xf32>, vector<128x2xf32> -> vector<128x2xf32>
    %6 = arith.truncf %3 : vector<128x128xf32> to vector<128x128xbf16>
    %c0_6 = arith.constant 0 : index
    %c0_7 = arith.constant 0 : index
    %7 = vector.load %arg4[%c0_6, %c0_7] : memref<128x128xbf16, #tpu.memory_space<vmem>>, vector<128x128xbf16>
    tpu.vector_store %arg4[%c0_6, %c0_7], %6 {strides = array<i32>} : memref<128x128xbf16, #tpu.memory_space<vmem>>, vector<128x128xbf16>,
    %c0_8 = arith.constant 0 : index
    %c0_9 = arith.constant 0 : index
    %8 = vector.load %arg5[%c0_8, %c0_9] : memref<128x2xf32, #tpu.memory_space<vmem>>, vector<128x2xf32>
    tpu.vector_store %arg5[%c0_8, %c0_9], %5 {strides = array<i32>} : memref<128x2xf32, #tpu.memory_space<vmem>>, vector<128x2xf32>,
    return
  }
  func.func @transform_0(%arg0: i32) -> (i32, i32) {
    %c0_i32 = arith.constant 0 : i32
    %c0_i32_0 = arith.constant 0 : i32
    return %arg0, %c0_i32 : i32, i32
  }
  func.func @transform_1(%arg0: i32) -> (i32, i32) {
    %c0_i32 = arith.constant 0 : i32
    %c0_i32_0 = arith.constant 0 : i32
    %c0_i32_1 = arith.constant 0 : i32
    return %c0_i32, %c0_i32_0 : i32, i32
  }
  func.func @transform_2(%arg0: i32) -> (i32, i32) {
    %c0_i32 = arith.constant 0 : i32
    %c0_i32_0 = arith.constant 0 : i32
    %c0_i32_1 = arith.constant 0 : i32
    return %c0_i32, %c0_i32_0 : i32, i32
  }
  func.func @transform_3(%arg0: i32) -> (i32, i32) {
    %c0_i32 = arith.constant 0 : i32
    %c0_i32_0 = arith.constant 0 : i32
    return %arg0, %c0_i32 : i32, i32
  }
  func.func @transform_4(%arg0: i32) -> (i32, i32) {
    %c0_i32 = arith.constant 0 : i32
    %c0_i32_0 = arith.constant 0 : i32
    return %arg0, %c0_i32 : i32, i32
  }
}

</mosaic_0001>

<llo_original>
// kernel: tpu_custom_call.1
$region0: #{tpu_custom_call.1}
  #allocation0 [shape = 'u32[]', space=smem, size = 0x4, offset = 0x4, fixed_abs, tag = 'smem constant byte address 0x4 - core index']
  #allocation1 [shape = 'u32[144,128]{1,0:T(1,128)}', space=vmem, size = 0x12000, scoped, tag = 'internal scratch']
  %s0 = inlined_call_operand.hbm [shape: f32[256,128], index: 0, kind: input, shape index: {}]
  %s1 = inlined_call_operand.vmem [shape: bf16[128,128], index: 1, kind: input, shape index: {}]
  %s2 = inlined_call_operand.vmem [shape: f32[128,2], index: 2, kind: input, shape index: {}]
  %s3 = inlined_call_operand.hbm [shape: bf16[256,128], index: 3, kind: output, shape index: {0}]
  %s4 = inlined_call_operand.vmem [shape: f32[256,2], index: 4, kind: output, shape index: {1}]
  %5 = xla_tuple %s3, %s4
  %s6 = sld [smem:[#allocation0]]
  $region57: #{tpu_custom_call.1} parent=0
    _
  %s8 = ssub.s32 1, %s6
  %s9 = scalar_select 0, %s8, %s6
  $region1: #{tpu_custom_call.1} parent=0
    #allocation2 [shape = 'u8[131072]{0}', space=vmem, size = 0x20000, scoped, tag = 'input window, operand 0']
    #allocation3 [shape = 's32[2]{0}', space=sflag, size = 0x8, scoped, tag = 'scoped memory for tpu_custom_call.1']
    #allocation4 [shape = 's32[2]{0}', space=sflag, size = 0x8, scoped, tag = 'scoped memory for tpu_custom_call.1']
    #allocation5 [shape = 'u8[65536]{0}', space=vmem, size = 0x10000, scoped, tag = 'output window, operand 0']
    %10 = vsyncpa [#allocation3], 0
    %s11 = scalar_lea.sflag [#allocation3], 1
    %12 = vsyncpa %s11, 0
    %13 = vsyncpa [#allocation4], 0
    %s14 = scalar_lea.sflag [#allocation4], 1
    %15 = vsyncpa %s14, 0
    loop: start=0, step=1, limit=4
    $region2: #{tpu_custom_call.1} parent=1 // loop_pre_header
      _
    $region3: #{tpu_custom_call.1} parent=1 // loop_header
      %s17 = sphi 0, %s21
      %p18 = scmp.ge.s32.totalorder %s17, 4
      %s27 = sphi 0, %s29
      %s30 = sphi 0, %s27
      %s31 = sphi 0, %s30
      %s47 = sphi 0, %s31
      %s51 = sphi 0, %s51
      %s53 = sphi 0, %s51
      %s54 = sphi 0, %s53
      %s68 = sphi 0, %s54
      %s72 = sphi 0, %s72
      %s74 = sphi 0, %s72
      %s75 = sphi 0, %s74
      %s89 = sphi 0, %s75
      %s95 = sphi 0, %s97
      %s98 = sphi 0, %s95
      %s99 = sphi 0, %s98
      %s115 = sphi 0, %s99
      %s121 = sphi 0, %s123
      %s124 = sphi 0, %s121
      %s125 = sphi 0, %s124
      %s141 = sphi 0, %s125
    $region4: #{tpu_custom_call.1} parent=1 // loop_header_branch
      %20 = sbr.rel (%p18) target = $region8
    $region5: #{tpu_custom_call.1} parent=1 // loop_body
      %s22 = ssub.s32 %s17, 1
      %s23 = ssub.s32 %s17, 2
      %s24 = sadd.s32 %s17, 1
      %s25 = ssub.s32 %s17, %s24
      %p26 = scmp.eq.s32.totalorder %s25, 0
      %s28 = sadd.s32 %s27, 1
      %s29 = scalar_select %p26, %s27, %s28
      %p32 = pneg %p26
      %p33 = scmp.eq.s32.totalorder %s17, 1
      %p34 = por %p32, %p33
      %p35 = scmp.ne.s32.totalorder %s27, %s30
      %p36 = scmp.eq.s32.totalorder %s17, 0
      %p37 = por %p35, %p36
      %p38 = scmp.ne.s32.totalorder %s27, %s30
      %p39 = scmp.eq.s32.totalorder %s22, 1
      %p40 = por %p38, %p39
      %p41 = scmp.ne.s32.totalorder %s30, %s31
      %p42 = scmp.eq.s32.totalorder %s22, 0
      %p43 = por %p41, %p42
      %p44 = scmp.ne.s32.totalorder %s30, %s31
      %p45 = scmp.eq.s32.totalorder %s23, 1
      %p46 = por %p44, %p45
      %p48 = scmp.ne.s32.totalorder %s31, %s47
      %p49 = scmp.eq.s32.totalorder %s23, 0
      %p50 = por %p48, %p49
      %s52 = sadd.s32 %s51, 1
      %p55 = scmp.eq.s32.totalorder %s17, 1
      %p56 = scmp.ne.s32.totalorder %s51, %s53
      %p57 = scmp.eq.s32.totalorder %s17, 0
      %p58 = por %p56, %p57
      %p59 = scmp.ne.s32.totalorder %s51, %s53
      %p60 = scmp.eq.s32.totalorder %s22, 1
      %p61 = por %p59, %p60
      %p62 = scmp.ne.s32.totalorder %s53, %s54
      %p63 = scmp.eq.s32.totalorder %s22, 0
      %p64 = por %p62, %p63
      %p65 = scmp.ne.s32.totalorder %s53, %s54
      %p66 = scmp.eq.s32.totalorder %s23, 1
      %p67 = por %p65, %p66
      %p69 = scmp.ne.s32.totalorder %s54, %s68
      %p70 = scmp.eq.s32.totalorder %s23, 0
      %p71 = por %p69, %p70
      %s73 = sadd.s32 %s72, 1
      %p76 = scmp.eq.s32.totalorder %s17, 1
      %p77 = scmp.ne.s32.totalorder %s72, %s74
      %p78 = scmp.eq.s32.totalorder %s17, 0
      %p79 = por %p77, %p78
      %p80 = scmp.ne.s32.totalorder %s72, %s74
      %p81 = scmp.eq.s32.totalorder %s22, 1
      %p82 = por %p80, %p81
      %p83 = scmp.ne.s32.totalorder %s74, %s75
      %p84 = scmp.eq.s32.totalorder %s22, 0
      %p85 = por %p83, %p84
      %p86 = scmp.ne.s32.totalorder %s74, %s75
      %p87 = scmp.eq.s32.totalorder %s23, 1
      %p88 = por %p86, %p87
      %p90 = scmp.ne.s32.totalorder %s75, %s89
      %p91 = scmp.eq.s32.totalorder %s23, 0
      %p92 = por %p90, %p91
      %s93 = ssub.s32 %s17, %s24
      %p94 = scmp.eq.s32.totalorder %s93, 0
      %s96 = sadd.s32 %s95, 1
      %s97 = scalar_select %p94, %s95, %s96
      %p100 = pneg %p94
      %p101 = scmp.eq.s32.totalorder %s17, 1
      %p102 = por %p100, %p101
      %p103 = scmp.ne.s32.totalorder %s95, %s98
      %p104 = scmp.eq.s32.totalorder %s17, 0
      %p105 = por %p103, %p104
      %p106 = scmp.ne.s32.totalorder %s95, %s98
      %p107 = scmp.eq.s32.totalorder %s22, 1
      %p108 = por %p106, %p107
      %p109 = scmp.ne.s32.totalorder %s98, %s99
      %p110 = scmp.eq.s32.totalorder %s22, 0
      %p111 = por %p109, %p110
      %p112 = scmp.ne.s32.totalorder %s98, %s99
      %p113 = scmp.eq.s32.totalorder %s23, 1
      %p114 = por %p112, %p113
      %p116 = scmp.ne.s32.totalorder %s99, %s115
      %p117 = scmp.eq.s32.totalorder %s23, 0
      %p118 = por %p116, %p117
      %s119 = ssub.s32 %s17, %s24
      %p120 = scmp.eq.s32.totalorder %s119, 0
      %s122 = sadd.s32 %s121, 1
      %s123 = scalar_select %p120, %s121, %s122
      %p126 = pneg %p120
      %p127 = scmp.eq.s32.totalorder %s17, 1
      %p128 = por %p126, %p127
      %p129 = scmp.ne.s32.totalorder %s121, %s124
      %p130 = scmp.eq.s32.totalorder %s17, 0
      %p131 = por %p129, %p130
      %p132 = scmp.ne.s32.totalorder %s121, %s124
      %p133 = scmp.eq.s32.totalorder %s22, 1
      %p134 = por %p132, %p133
      %p135 = scmp.ne.s32.totalorder %s124, %s125
      %p136 = scmp.eq.s32.totalorder %s22, 0
      %p137 = por %p135, %p136
      %p138 = scmp.ne.s32.totalorder %s124, %s125
      %p139 = scmp.eq.s32.totalorder %s23, 1
      %p140 = por %p138, %p139
      %p142 = scmp.ne.s32.totalorder %s125, %s141
      %p143 = scmp.eq.s32.totalorder %s23, 0
      %p144 = por %p142, %p143
      %p145 = scmp.le.s32.totalorder 1, %s17
      %p146 = scmp.lt.s32.totalorder %s17, 3
      %p147 = pnand %p145, %p146
      %p148 = pneg %p147
      // Predicated region
      $region9: #{tpu_custom_call.1} parent=5 // pred_check
        _
      $region10: #{tpu_custom_call.1} parent=5 // pred_check_branch
        %150 = sbr.rel (%p147) target = $region12
      $region11: #{tpu_custom_call.1} parent=5 // pred_region
        %s151 = ssub.s32 %s17, 1
        // Predicated region
        $region13: #{tpu_custom_call.1} parent=11 // pred_check
          %p152 = pneg %p64
        $region14: #{tpu_custom_call.1} parent=11 // pred_check_branch
          %154 = sbr.rel (%p152) target = $region16
        $region15: #{tpu_custom_call.1} parent=11 // pred_region
          _
        $region16: #{tpu_custom_call.1} parent=11 // pred_fallthru
          _
        // Predicated region
        $region17: #{tpu_custom_call.1} parent=11 // pred_check
          %p155 = pneg %p85
        $region18: #{tpu_custom_call.1} parent=11 // pred_check_branch
          %157 = sbr.rel (%p155) target = $region20
        $region19: #{tpu_custom_call.1} parent=11 // pred_region
          _
        $region20: #{tpu_custom_call.1} parent=11 // pred_fallthru
          _
      $region12: #{tpu_custom_call.1} parent=5 // pred_fallthru
        _
      %p158 = scmp.lt.s32.totalorder %s17, 2
      // Predicated region
      $region21: #{tpu_custom_call.1} parent=5 // pred_check
        %p159 = pneg %p158
      $region22: #{tpu_custom_call.1} parent=5 // pred_check_branch
        %161 = sbr.rel (%p159) target = $region24
      $region23: #{tpu_custom_call.1} parent=5 // pred_region
        // Predicated region
        $region25: #{tpu_custom_call.1} parent=23 // pred_check
          %p162 = pneg %p37
        $region26: #{tpu_custom_call.1} parent=23 // pred_check_branch
          %164 = sbr.rel (%p162) target = $region28
        $region27: #{tpu_custom_call.1} parent=23 // pred_region
          %s165 = sand.u32 %s27, 1
          %s166 = scalar_lea.sflag [#allocation3], %s165
          %s167 = sand.u32 %s27, 1
          %s168 = smul.addr %s167, 128
          %s169 = scalar_lea.vmem [#allocation2], %s168
          %s170 = smul.u32 16, %s17
          %s172 = ssub.s32 2048, 2048
          %173 = vsyncadd %s166, %s172
          %s174 = smul.addr %s170, 128
          %s175 = scalar_lea.hbm %s0, %s174
          %s176 = sshll.u32 %s169, 4
          %s177 = int_to_ptr.vmem [resolvable:$true] %s176
          %182 = dma.hbm_to_vmem [thread:$0]  %s175, 2048, %s177, %s166, 128, 128, 8
        $region28: #{tpu_custom_call.1} parent=23 // pred_fallthru
          _
      $region24: #{tpu_custom_call.1} parent=5 // pred_fallthru
        _
      %p183 = scmp.le.s32.totalorder 1, %s17
      %p184 = scmp.lt.s32.totalorder %s17, 3
      %p185 = pnand %p183, %p184
      %p186 = pneg %p185
      // Predicated region
      $region29: #{tpu_custom_call.1} parent=5 // pred_check
        _
      $region30: #{tpu_custom_call.1} parent=5 // pred_check_branch
        %188 = sbr.rel (%p185) target = $region32
      $region31: #{tpu_custom_call.1} parent=5 // pred_region
        %s189 = ssub.s32 %s17, 1
        %s190 = sand.u32 %s30, 1
        %s191 = scalar_lea.sflag [#allocation3], %s190
        %s192 = sand.u32 %s30, 1
        %s193 = smul.addr %s192, 128
        %s194 = scalar_lea.vmem [#allocation2], %s193
        // Predicated region
        $region33: #{tpu_custom_call.1} parent=31 // pred_check
          %p195 = pneg %p43
        $region34: #{tpu_custom_call.1} parent=31 // pred_check_branch
          %197 = sbr.rel (%p195) target = $region36
        $region35: #{tpu_custom_call.1} parent=31 // pred_region
          %198 = dma.done %s191, 2048
        $region36: #{tpu_custom_call.1} parent=31 // pred_fallthru
          _
        %s199 = sand.u32 %s30, 1
        %s200 = scalar_lea.sflag [#allocation3], %s199
        %s201 = sand.u32 %s30, 1
        %s202 = smul.addr %s201, 128
        %s203 = scalar_lea.vmem [#allocation2], %s202
        %p204 = pneg %p43
        %p205 = pneg %p40
        %p206 = pneg %p64
        %p207 = pneg %p61
        %p208 = pneg %p85
        %p209 = pneg %p82
        %p210 = pneg %p111
        %p211 = pneg %p108
        %s212 = sand.u32 %s98, 1
        %s213 = scalar_lea.sflag [#allocation4], %s212
        %s214 = sand.u32 %s98, 1
        %s215 = smul.addr %s214, 64
        %s216 = scalar_lea.vmem [#allocation5], %s215
        %p217 = pneg %p137
        %p218 = pneg %p134
        %s219 = smul.u32 16, %s22
        %p220 = scmp.lt.s32.totalorder %s219, 31
        %s221 = scalar_select %p220, %s219, 31
        %s222 = smul.addr %s221, 8
        %s223 = scalar_lea.vmem %s4, %s222
        %s224 = smul.u32 16, %s22
        %s225 = smul.u32 16, %s22
        %s226 = smul.u32 16, %s22
        %p227 = scmp.lt.s32.totalorder %s226, 31
        %s228 = scalar_select %p227, %s226, 31
        %s229 = smul.addr %s228, 8
        %s230 = scalar_lea.vmem %s4, %s229
        %s231 = smul.u32 16, %s22
        %v233 = vld [vmem:[%s194] sm:$0xff]
        %v234 = vld [vmem:[%s194 + $0x8] sm:$0xff]
        %v235 = vld [vmem:[%s194 + $0x10] sm:$0xff]
        %v236 = vld [vmem:[%s194 + $0x18] sm:$0xff]
        %v237 = vld [vmem:[%s194 + $0x20] sm:$0xff]
        %v238 = vld [vmem:[%s194 + $0x28] sm:$0xff]
        %v239 = vld [vmem:[%s194 + $0x30] sm:$0xff]
        %v240 = vld [vmem:[%s194 + $0x38] sm:$0xff]
        %v241 = vld [vmem:[%s194 + $0x40] sm:$0xff]
        %v242 = vld [vmem:[%s194 + $0x48] sm:$0xff]
        %v243 = vld [vmem:[%s194 + $0x50] sm:$0xff]
        %v244 = vld [vmem:[%s194 + $0x58] sm:$0xff]
        %v245 = vld [vmem:[%s194 + $0x60] sm:$0xff]
        %v246 = vld [vmem:[%s194 + $0x68] sm:$0xff]
        %v247 = vld [vmem:[%s194 + $0x70] sm:$0xff]
        %v248 = vld [vmem:[%s194 + $0x78] sm:$0xff]
        %v249 = vpack.c.bf16 %v234, %v233
        %v250 = vpack.c.bf16 %v236, %v235
        %v251 = vpack.c.bf16 %v238, %v237
        %v252 = vpack.c.bf16 %v240, %v239
        %v253 = vpack.c.bf16 %v242, %v241
        %v254 = vpack.c.bf16 %v244, %v243
        %v255 = vpack.c.bf16 %v246, %v245
        %v256 = vpack.c.bf16 %v248, %v247
        %v257 = vld [vmem:[%s1] sm:$0xf]
        %v258 = vld [vmem:[%s1 + $0x4] sm:$0xf]
        %v259 = vld [vmem:[%s1 + $0x8] sm:$0xf]
        %v260 = vld [vmem:[%s1 + $0xc] sm:$0xf]
        %v261 = vld [vmem:[%s1 + $0x10] sm:$0xf]
        %v262 = vld [vmem:[%s1 + $0x14] sm:$0xf]
        %v263 = vld [vmem:[%s1 + $0x18] sm:$0xf]
        %v264 = vld [vmem:[%s1 + $0x1c] sm:$0xf]
        %v265 = vld [vmem:[%s1 + $0x20] sm:$0xf]
        %v266 = vld [vmem:[%s1 + $0x24] sm:$0xf]
        %v267 = vld [vmem:[%s1 + $0x28] sm:$0xf]
        %v268 = vld [vmem:[%s1 + $0x2c] sm:$0xf]
        %v269 = vld [vmem:[%s1 + $0x30] sm:$0xf]
        %v270 = vld [vmem:[%s1 + $0x34] sm:$0xf]
        %v271 = vld [vmem:[%s1 + $0x38] sm:$0xf]
        %v272 = vld [vmem:[%s1 + $0x3c] sm:$0xf]
        %v289 = vunpack.c.l.b16 %v257
        %v290 = vunpack.c.l.b16 %v258
        %v291 = vunpack.c.l.b16 %v259
        %v292 = vunpack.c.l.b16 %v260
        %v293 = vunpack.c.l.b16 %v261
        %v294 = vunpack.c.l.b16 %v262
        %v295 = vunpack.c.l.b16 %v263
        %v296 = vunpack.c.l.b16 %v264
        %v297 = vunpack.c.l.b16 %v265
        %v298 = vunpack.c.l.b16 %v266
        %v299 = vunpack.c.l.b16 %v267
        %v300 = vunpack.c.l.b16 %v268
        %v301 = vunpack.c.l.b16 %v269
        %v302 = vunpack.c.l.b16 %v270
        %v303 = vunpack.c.l.b16 %v271
        %v304 = vunpack.c.l.b16 %v272
        %v305 = vpack.c.b16 %v290, %v289
        %v306 = vpack.c.b16 %v292, %v291
        %v307 = vpack.c.b16 %v294, %v293
        %v308 = vpack.c.b16 %v296, %v295
        %v309 = vpack.c.b16 %v298, %v297
        %v310 = vpack.c.b16 %v300, %v299
        %v311 = vpack.c.b16 %v302, %v301
        %v312 = vpack.c.b16 %v304, %v303
        %321 = vmatprep.subr.bf16.mxu0 0
        %322 = vmatpush1.bf16.msra.mxu0 %v305
        %323 = vmatprep.subr.bf16.mxu0 0
        %324 = vmatpush1.bf16.msra.mxu0 %v306
        %325 = vmatprep.subr.bf16.mxu0 0
        %326 = vmatpush1.bf16.msra.mxu0 %v307
        %327 = vmatprep.subr.bf16.mxu0 0
        %328 = vmatpush1.bf16.msra.mxu0 %v308
        %329 = vmatprep.subr.bf16.mxu0 0
        %330 = vmatpush1.bf16.msra.mxu0 %v309
        %331 = vmatprep.subr.bf16.mxu0 0
        %332 = vmatpush1.bf16.msra.mxu0 %v310
        %333 = vmatprep.subr.bf16.mxu0 0
        %334 = vmatpush1.bf16.msra.mxu0 %v311
        %335 = vmatprep.subr.bf16.mxu0 0
        %336 = vmatpush1.bf16.msra.mxu0 %v312
        %337 = vmatprep.subr.bf16.mxu0 0
        %338 = vmatpush1.bf16.msra.mxu0 0
        %339 = vmatprep.subr.bf16.mxu0 0
        %340 = vmatpush1.bf16.msra.mxu0 0
        %341 = vmatprep.subr.bf16.mxu0 0
        %342 = vmatpush1.bf16.msra.mxu0 0
        %343 = vmatprep.subr.bf16.mxu0 0
        %344 = vmatpush1.bf16.msra.mxu0 0
        %345 = vmatprep.subr.bf16.mxu0 0
        %346 = vmatpush1.bf16.msra.mxu0 0
        %347 = vmatprep.subr.bf16.mxu0 0
        %348 = vmatpush1.bf16.msra.mxu0 0
        %349 = vmatprep.subr.bf16.mxu0 0
        %350 = vmatpush1.bf16.msra.mxu0 0
        %351 = vmatprep.subr.bf16.mxu0 0
        %352 = vmatpush1.bf16.msra.mxu0 0
        %353 = vmatprep.mubr.bf16.mxu0 0
        %354 = vmatmul.mubr.bf16.gmra.mrb[0].mxu0 %v249
        %v355 = vpop.f32.mrb[0].mxu0
        %v356 = vadd.f32 0.0, %v355
        %v357 = vpop.f32.mrb[0].mxu0
        %v358 = vpop.f32.mrb[0].mxu0
        %v359 = vadd.f32 0.0, %v358
        %v360 = vpop.f32.mrb[0].mxu0
        %361 = vmatprep.mubr.bf16.mxu0 0
        %362 = vmatmul.mubr.bf16.gmra.mrb[0].mxu0 %v250
        %v363 = vpop.f32.mrb[0].mxu0
        %v364 = vadd.f32 0.0, %v363
        %v365 = vpop.f32.mrb[0].mxu0
        %v366 = vpop.f32.mrb[0].mxu0
        %v367 = vadd.f32 0.0, %v366
        %v368 = vpop.f32.mrb[0].mxu0
        %369 = vmatprep.mubr.bf16.mxu0 0
        %370 = vmatmul.mubr.bf16.gmra.mrb[0].mxu0 %v251
        %v371 = vpop.f32.mrb[0].mxu0
        %v372 = vadd.f32 0.0, %v371
        %v373 = vpop.f32.mrb[0].mxu0
        %v374 = vpop.f32.mrb[0].mxu0
        %v375 = vadd.f32 0.0, %v374
        %v376 = vpop.f32.mrb[0].mxu0
        %377 = vmatprep.mubr.bf16.mxu0 0
        %378 = vmatmul.mubr.bf16.gmra.mrb[0].mxu0 %v252
        %v379 = vpop.f32.mrb[0].mxu0
        %v380 = vadd.f32 0.0, %v379
        %v381 = vpop.f32.mrb[0].mxu0
        %v382 = vpop.f32.mrb[0].mxu0
        %v383 = vadd.f32 0.0, %v382
        %v384 = vpop.f32.mrb[0].mxu0
        %385 = vmatprep.mubr.bf16.mxu0 0
        %386 = vmatmul.mubr.bf16.gmra.mrb[0].mxu0 %v253
        %v387 = vpop.f32.mrb[0].mxu0
        %v388 = vadd.f32 0.0, %v387
        %v389 = vpop.f32.mrb[0].mxu0
        %v390 = vpop.f32.mrb[0].mxu0
        %v391 = vadd.f32 0.0, %v390
        %v392 = vpop.f32.mrb[0].mxu0
        %393 = vmatprep.mubr.bf16.mxu0 0
        %394 = vmatmul.mubr.bf16.gmra.mrb[0].mxu0 %v254
        %v395 = vpop.f32.mrb[0].mxu0
        %v396 = vadd.f32 0.0, %v395
        %v397 = vpop.f32.mrb[0].mxu0
        %v398 = vpop.f32.mrb[0].mxu0
        %v399 = vadd.f32 0.0, %v398
        %v400 = vpop.f32.mrb[0].mxu0
        %401 = vmatprep.mubr.bf16.mxu0 0
        %402 = vmatmul.mubr.bf16.gmra.mrb[0].mxu0 %v255
        %v403 = vpop.f32.mrb[0].mxu0
        %v404 = vadd.f32 0.0, %v403
        %v405 = vpop.f32.mrb[0].mxu0
        %v406 = vpop.f32.mrb[0].mxu0
        %v407 = vadd.f32 0.0, %v406
        %v408 = vpop.f32.mrb[0].mxu0
        %409 = vmatprep.mubr.bf16.mxu0 0
        %410 = vmatmul.mubr.bf16.gmra.mrb[0].mxu0 %v256
        %v411 = vpop.f32.mrb[0].mxu0
        %v412 = vadd.f32 0.0, %v411
        %v413 = vpop.f32.mrb[0].mxu0
        %v414 = vpop.f32.mrb[0].mxu0
        %v415 = vadd.f32 0.0, %v414
        %v416 = vpop.f32.mrb[0].mxu0
        %417 = vdwg.mxu0
        %v418 = vld [vmem:[%s2] sm:$0xff]
        %v419 = vld [vmem:[%s2 + $0x8] sm:$0xff]
        %v420 = vld [vmem:[%s2 + $0x10] sm:$0xff]
        %v421 = vld [vmem:[%s2 + $0x18] sm:$0xff]
        %v422 = vld [vmem:[%s2 + $0x20] sm:$0xff]
        %v423 = vld [vmem:[%s2 + $0x28] sm:$0xff]
        %v424 = vld [vmem:[%s2 + $0x30] sm:$0xff]
        %v425 = vld [vmem:[%s2 + $0x38] sm:$0xff]
        %v426 = vld [vmem:[%s2 + $0x40] sm:$0xff]
        %v427 = vld [vmem:[%s2 + $0x48] sm:$0xff]
        %v428 = vld [vmem:[%s2 + $0x50] sm:$0xff]
        %v429 = vld [vmem:[%s2 + $0x58] sm:$0xff]
        %v430 = vld [vmem:[%s2 + $0x60] sm:$0xff]
        %v431 = vld [vmem:[%s2 + $0x68] sm:$0xff]
        %v432 = vld [vmem:[%s2 + $0x70] sm:$0xff]
        %v433 = vld [vmem:[%s2 + $0x78] sm:$0xff]
        %434 = vmatprep.subr.mxu0 0.0
        %435 = vmatpush1.msra.mxu0 %v418
        %436 = vmatprep.subr.mxu0 0.0
        %437 = vmatpush1.msra.mxu0 %v419
        %438 = vmatprep.subr.mxu0 0.0
        %439 = vmatpush1.msra.mxu0 %v420
        %440 = vmatprep.subr.mxu0 0.0
        %441 = vmatpush1.msra.mxu0 %v421
        %442 = vmatprep.subr.mxu0 0.0
        %443 = vmatpush1.msra.mxu0 %v422
        %444 = vmatprep.subr.mxu0 0.0
        %445 = vmatpush1.msra.mxu0 %v423
        %446 = vmatprep.subr.mxu0 0.0
        %447 = vmatpush1.msra.mxu0 %v424
        %448 = vmatprep.subr.mxu0 0.0
        %449 = vmatpush1.msra.mxu0 %v425
        %450 = vmatprep.subr.mxu0 0.0
        %451 = vmatpush1.msra.mxu0 %v426
        %452 = vmatprep.subr.mxu0 0.0
        %453 = vmatpush1.msra.mxu0 %v427
        %454 = vmatprep.subr.mxu0 0.0
        %455 = vmatpush1.msra.mxu0 %v428
        %456 = vmatprep.subr.mxu0 0.0
        %457 = vmatpush1.msra.mxu0 %v429
        %458 = vmatprep.subr.mxu0 0.0
        %459 = vmatpush1.msra.mxu0 %v430
        %460 = vmatprep.subr.mxu0 0.0
        %461 = vmatpush1.msra.mxu0 %v431
        %462 = vmatprep.subr.mxu0 0.0
        %463 = vmatpush1.msra.mxu0 %v432
        %464 = vmatprep.subr.mxu0 0.0
        %465 = vmatpush1.msra.mxu0 %v433
        %466 = vmatprep.subr.mxu0 0.0
        %467 = vmatpush1.msra.mxu0 0.0
        %468 = vmatprep.subr.mxu0 0.0
        %469 = vmatpush1.msra.mxu0 0.0
        %470 = vmatprep.subr.mxu0 0.0
        %471 = vmatpush1.msra.mxu0 0.0
        %472 = vmatprep.subr.mxu0 0.0
        %473 = vmatpush1.msra.mxu0 0.0
        %474 = vmatprep.subr.mxu0 0.0
        %475 = vmatpush1.msra.mxu0 0.0
        %476 = vmatprep.subr.mxu0 0.0
        %477 = vmatpush1.msra.mxu0 0.0
        %478 = vmatprep.subr.mxu0 0.0
        %479 = vmatpush1.msra.mxu0 0.0
        %480 = vmatprep.subr.mxu0 0.0
        %481 = vmatpush1.msra.mxu0 0.0
        %482 = vmatprep.subr.mxu0 0.0
        %483 = vmatpush1.msra.mxu0 0.0
        %484 = vmatprep.subr.mxu0 0.0
        %485 = vmatpush1.msra.mxu0 0.0
        %486 = vmatprep.subr.mxu0 0.0
        %487 = vmatpush1.msra.mxu0 0.0
        %488 = vmatprep.subr.mxu0 0.0
        %489 = vmatpush1.msra.mxu0 0.0
        %490 = vmatprep.subr.mxu0 0.0
        %491 = vmatpush1.msra.mxu0 0.0
        %492 = vmatprep.subr.mxu0 0.0
        %493 = vmatpush1.msra.mxu0 0.0
        %494 = vmatprep.subr.mxu0 0.0
        %495 = vmatpush1.msra.mxu0 0.0
        %496 = vmatprep.subr.mxu0 0.0
        %497 = vmatpush1.msra.mxu0 0.0
        %498 = vmatprep.mubr.f32.mxu0 0.0
        %499 = vmatmul.mubr.f32.gmra.mrb[0].mxu0 %v356
        %v500 = vpop.f32.mrb[0].mxu0
        %v501 = vadd.f32 0.0, %v500
        %v502 = vpop.f32.mrb[0].mxu0
        %503 = vmatprep.mubr.f32.mxu0 0.0
        %504 = vmatmul.mubr.f32.gmra.mrb[0].mxu0 %v359
        %v505 = vpop.f32.mrb[0].mxu0
        %v506 = vadd.f32 0.0, %v505
        %v507 = vpop.f32.mrb[0].mxu0
        %508 = vmatprep.mubr.f32.mxu0 0.0
        %509 = vmatmul.mubr.f32.gmra.mrb[0].mxu0 %v364
        %v510 = vpop.f32.mrb[0].mxu0
        %v511 = vadd.f32 0.0, %v510
        %v512 = vpop.f32.mrb[0].mxu0
        %513 = vmatprep.mubr.f32.mxu0 0.0
        %514 = vmatmul.mubr.f32.gmra.mrb[0].mxu0 %v367
        %v515 = vpop.f32.mrb[0].mxu0
        %v516 = vadd.f32 0.0, %v515
        %v517 = vpop.f32.mrb[0].mxu0
        %518 = vmatprep.mubr.f32.mxu0 0.0
        %519 = vmatmul.mubr.f32.gmra.mrb[0].mxu0 %v372
        %v520 = vpop.f32.mrb[0].mxu0
        %v521 = vadd.f32 0.0, %v520
        %v522 = vpop.f32.mrb[0].mxu0
        %523 = vmatprep.mubr.f32.mxu0 0.0
        %524 = vmatmul.mubr.f32.gmra.mrb[0].mxu0 %v375
        %v525 = vpop.f32.mrb[0].mxu0
        %v526 = vadd.f32 0.0, %v525
        %v527 = vpop.f32.mrb[0].mxu0
        %528 = vmatprep.mubr.f32.mxu0 0.0
        %529 = vmatmul.mubr.f32.gmra.mrb[0].mxu0 %v380
        %v530 = vpop.f32.mrb[0].mxu0
        %v531 = vadd.f32 0.0, %v530
        %v532 = vpop.f32.mrb[0].mxu0
        %533 = vmatprep.mubr.f32.mxu0 0.0
        %534 = vmatmul.mubr.f32.gmra.mrb[0].mxu0 %v383
        %v535 = vpop.f32.mrb[0].mxu0
        %v536 = vadd.f32 0.0, %v535
        %v537 = vpop.f32.mrb[0].mxu0
        %538 = vmatprep.mubr.f32.mxu0 0.0
        %539 = vmatmul.mubr.f32.gmra.mrb[0].mxu0 %v388
        %v540 = vpop.f32.mrb[0].mxu0
        %v541 = vadd.f32 0.0, %v540
        %v542 = vpop.f32.mrb[0].mxu0
        %543 = vmatprep.mubr.f32.mxu0 0.0
        %544 = vmatmul.mubr.f32.gmra.mrb[0].mxu0 %v391
        %v545 = vpop.f32.mrb[0].mxu0
        %v546 = vadd.f32 0.0, %v545
        %v547 = vpop.f32.mrb[0].mxu0
        %548 = vmatprep.mubr.f32.mxu0 0.0
        %549 = vmatmul.mubr.f32.gmra.mrb[0].mxu0 %v396
        %v550 = vpop.f32.mrb[0].mxu0
        %v551 = vadd.f32 0.0, %v550
        %v552 = vpop.f32.mrb[0].mxu0
        %553 = vmatprep.mubr.f32.mxu0 0.0
        %554 = vmatmul.mubr.f32.gmra.mrb[0].mxu0 %v399
        %v555 = vpop.f32.mrb[0].mxu0
        %v556 = vadd.f32 0.0, %v555
        %v557 = vpop.f32.mrb[0].mxu0
        %558 = vmatprep.mubr.f32.mxu0 0.0
        %559 = vmatmul.mubr.f32.gmra.mrb[0].mxu0 %v404
        %v560 = vpop.f32.mrb[0].mxu0
        %v561 = vadd.f32 0.0, %v560
        %v562 = vpop.f32.mrb[0].mxu0
        %563 = vmatprep.mubr.f32.mxu0 0.0
        %564 = vmatmul.mubr.f32.gmra.mrb[0].mxu0 %v407
        %v565 = vpop.f32.mrb[0].mxu0
        %v566 = vadd.f32 0.0, %v565
        %v567 = vpop.f32.mrb[0].mxu0
        %568 = vmatprep.mubr.f32.mxu0 0.0
        %569 = vmatmul.mubr.f32.gmra.mrb[0].mxu0 %v412
        %v570 = vpop.f32.mrb[0].mxu0
        %v571 = vadd.f32 0.0, %v570
        %v572 = vpop.f32.mrb[0].mxu0
        %573 = vmatprep.mubr.f32.mxu0 0.0
        %574 = vmatmul.mubr.f32.gmra.mrb[0].mxu0 %v415
        %v575 = vpop.f32.mrb[0].mxu0
        %v576 = vadd.f32 0.0, %v575
        %v577 = vpop.f32.mrb[0].mxu0
        %578 = vdwg.mxu0
        %v579 = vpack.c.bf16 %v359, %v356
        %v580 = vpack.c.bf16 %v367, %v364
        %v581 = vpack.c.bf16 %v375, %v372
        %v582 = vpack.c.bf16 %v383, %v380
        %v583 = vpack.c.bf16 %v391, %v388
        %v584 = vpack.c.bf16 %v399, %v396
        %v585 = vpack.c.bf16 %v407, %v404
        %v586 = vpack.c.bf16 %v415, %v412
        %v595 = vunpack.c.l.b16 %v579
        %v596 = vunpack.c.h.b16 %v579
        %v597 = vunpack.c.l.b16 %v580
        %v598 = vunpack.c.h.b16 %v580
        %v599 = vunpack.c.l.b16 %v581
        %v600 = vunpack.c.h.b16 %v581
        %v601 = vunpack.c.l.b16 %v582
        %v602 = vunpack.c.h.b16 %v582
        %v603 = vunpack.c.l.b16 %v583
        %v604 = vunpack.c.h.b16 %v583
        %v605 = vunpack.c.l.b16 %v584
        %v606 = vunpack.c.h.b16 %v584
        %v607 = vunpack.c.l.b16 %v585
        %v608 = vunpack.c.h.b16 %v585
        %v609 = vunpack.c.l.b16 %v586
        %v610 = vunpack.c.h.b16 %v586
        %v611 = vpack.c.b16 %v595, %v595
        %v612 = vpack.c.b16 %v596, %v596
        %v613 = vpack.c.b16 %v597, %v597
        %v614 = vpack.c.b16 %v598, %v598
        %v615 = vpack.c.b16 %v599, %v599
        %v616 = vpack.c.b16 %v600, %v600
        %v617 = vpack.c.b16 %v601, %v601
        %v618 = vpack.c.b16 %v602, %v602
        %v619 = vpack.c.b16 %v603, %v603
        %v620 = vpack.c.b16 %v604, %v604
        %v621 = vpack.c.b16 %v605, %v605
        %v622 = vpack.c.b16 %v606, %v606
        %v623 = vpack.c.b16 %v607, %v607
        %v624 = vpack.c.b16 %v608, %v608
        %v625 = vpack.c.b16 %v609, %v609
        %v626 = vpack.c.b16 %v610, %v610
        %643 = vst [vmem:[%s216] sm:$0xf] %v611
        %644 = vst [vmem:[%s216 + $0x4] sm:$0xf] %v612
        %645 = vst [vmem:[%s216 + $0x8] sm:$0xf] %v613
        %646 = vst [vmem:[%s216 + $0xc] sm:$0xf] %v614
        %647 = vst [vmem:[%s216 + $0x10] sm:$0xf] %v615
        %648 = vst [vmem:[%s216 + $0x14] sm:$0xf] %v616
        %649 = vst [vmem:[%s216 + $0x18] sm:$0xf] %v617
        %650 = vst [vmem:[%s216 + $0x1c] sm:$0xf] %v618
        %651 = vst [vmem:[%s216 + $0x20] sm:$0xf] %v619
        %652 = vst [vmem:[%s216 + $0x24] sm:$0xf] %v620
        %653 = vst [vmem:[%s216 + $0x28] sm:$0xf] %v621
        %654 = vst [vmem:[%s216 + $0x2c] sm:$0xf] %v622
        %655 = vst [vmem:[%s216 + $0x30] sm:$0xf] %v623
        %656 = vst [vmem:[%s216 + $0x34] sm:$0xf] %v624
        %657 = vst [vmem:[%s216 + $0x38] sm:$0xf] %v625
        %658 = vst [vmem:[%s216 + $0x3c] sm:$0xf] %v626
        %vm659 = vcmask 15360
        %660 = vst.msk [vmem:[%s230] sm:$0xff] %vm659, %v501
        %661 = vst.msk [vmem:[%s230 + $0x8] sm:$0xff] %vm659, %v506
        %662 = vst.msk [vmem:[%s230 + $0x10] sm:$0xff] %vm659, %v511
        %663 = vst.msk [vmem:[%s230 + $0x18] sm:$0xff] %vm659, %v516
        %664 = vst.msk [vmem:[%s230 + $0x20] sm:$0xff] %vm659, %v521
        %665 = vst.msk [vmem:[%s230 + $0x28] sm:$0xff] %vm659, %v526
        %666 = vst.msk [vmem:[%s230 + $0x30] sm:$0xff] %vm659, %v531
        %667 = vst.msk [vmem:[%s230 + $0x38] sm:$0xff] %vm659, %v536
        %668 = vst.msk [vmem:[%s230 + $0x40] sm:$0xff] %vm659, %v541
        %669 = vst.msk [vmem:[%s230 + $0x48] sm:$0xff] %vm659, %v546
        %670 = vst.msk [vmem:[%s230 + $0x50] sm:$0xff] %vm659, %v551
        %671 = vst.msk [vmem:[%s230 + $0x58] sm:$0xff] %vm659, %v556
        %672 = vst.msk [vmem:[%s230 + $0x60] sm:$0xff] %vm659, %v561
        %673 = vst.msk [vmem:[%s230 + $0x68] sm:$0xff] %vm659, %v566
        %674 = vst.msk [vmem:[%s230 + $0x70] sm:$0xff] %vm659, %v571
        %675 = vst.msk [vmem:[%s230 + $0x78] sm:$0xff] %vm659, %v576
        %s676 = sand.u32 %s98, 1
        %s677 = scalar_lea.sflag [#allocation4], %s676
        %s678 = sand.u32 %s98, 1
        %s679 = smul.addr %s678, 64
        %s680 = scalar_lea.vmem [#allocation5], %s679
        %s681 = smul.u32 16, %s22
        %p682 = scmp.lt.s32.totalorder %s681, 31
        %s683 = scalar_select %p682, %s681, 31
        %s684 = smul.addr %s683, 8
        %s685 = scalar_lea.vmem %s4, %s684
        // Predicated region
        $region37: #{tpu_custom_call.1} parent=31 // pred_check
          %p686 = pneg %p108
        $region38: #{tpu_custom_call.1} parent=31 // pred_check_branch
          %688 = sbr.rel (%p686) target = $region40
        $region39: #{tpu_custom_call.1} parent=31 // pred_region
          %s689 = smul.u32 16, %s22
          %s691 = ssub.s32 1024, 1024
          %692 = vsyncadd %s677, %s691
          %s693 = smul.addr %s689, 64
          %s694 = scalar_lea.hbm %s3, %s693
          %s695 = sshll.u32 %s680, 4
          %s696 = int_to_ptr.vmem [resolvable:$true] %s695
          %701 = dma.vmem_to_hbm [thread:$0]  %s696, 1024, %s694, %s677, 64, 64, 4
        $region40: #{tpu_custom_call.1} parent=31 // pred_fallthru
          _
        // Predicated region
        $region41: #{tpu_custom_call.1} parent=31 // pred_check
          %p702 = pneg %p134
        $region42: #{tpu_custom_call.1} parent=31 // pred_check_branch
          %704 = sbr.rel (%p702) target = $region44
        $region43: #{tpu_custom_call.1} parent=31 // pred_region
          %s705 = smul.u32 16, %s22
        $region44: #{tpu_custom_call.1} parent=31 // pred_fallthru
          _
      $region32: #{tpu_custom_call.1} parent=5 // pred_fallthru
        _
      %p706 = scmp.le.s32.totalorder 2, %s17
      // Predicated region
      $region45: #{tpu_custom_call.1} parent=5 // pred_check
        %p707 = pneg %p706
      $region46: #{tpu_custom_call.1} parent=5 // pred_check_branch
        %709 = sbr.rel (%p707) target = $region48
      $region47: #{tpu_custom_call.1} parent=5 // pred_region
        %s710 = ssub.s32 %s17, 2
        // Predicated region
        $region49: #{tpu_custom_call.1} parent=47 // pred_check
          %p711 = pneg %p114
        $region50: #{tpu_custom_call.1} parent=47 // pred_check_branch
          %713 = sbr.rel (%p711) target = $region52
        $region51: #{tpu_custom_call.1} parent=47 // pred_region
          %s714 = sand.u32 %s99, 1
          %s715 = scalar_lea.sflag [#allocation4], %s714
          %s716 = sand.u32 %s99, 1
          %s717 = smul.addr %s716, 64
          %s718 = scalar_lea.vmem [#allocation5], %s717
          %719 = dma.done %s715, 1024
        $region52: #{tpu_custom_call.1} parent=47 // pred_fallthru
          _
        // Predicated region
        $region53: #{tpu_custom_call.1} parent=47 // pred_check
          %p720 = pneg %p140
        $region54: #{tpu_custom_call.1} parent=47 // pred_check_branch
          %722 = sbr.rel (%p720) target = $region56
        $region55: #{tpu_custom_call.1} parent=47 // pred_region
          %s723 = smul.u32 16, %s23
          %p724 = scmp.lt.s32.totalorder %s723, 31
          %s725 = scalar_select %p724, %s723, 31
          %s726 = smul.addr %s725, 8
          %s727 = scalar_lea.vmem %s4, %s726
        $region56: #{tpu_custom_call.1} parent=47 // pred_fallthru
          _
      $region48: #{tpu_custom_call.1} parent=5 // pred_fallthru
        _
    $region6: #{tpu_custom_call.1} parent=1 // loop_footer
      %s21 = sadd.s32 1, %s17
    $region7: #{tpu_custom_call.1} parent=1 // loop_footer_branch
      %16 = sbr.rel target = $region3
    $region8: #{tpu_custom_call.1} parent=1 // loop_exit
      _
    %728 = vsyncpa [#allocation3], 1
    %s729 = scalar_lea.sflag [#allocation3], 1
    %730 = vsyncpa %s729, 1
    %731 = vsyncpa [#allocation4], 1
    %s732 = scalar_lea.sflag [#allocation4], 1
    %733 = vsyncpa %s732, 1

</llo_original>
